<compile_context>
chip_gen: v7x
topology: tpu7x:2x2x1
jax: 0.10.0
libtpu: 0.0.40
codegen_flags: <defaults>
</compile_context>

<pallas_src>
import functools

import jax
import jax.numpy as jnp
from jax import lax
from jax.experimental import pallas as pl
from jax.experimental.pallas import tpu as pltpu


# ----------------------------------------------------------------------------
# helpers
# ----------------------------------------------------------------------------
def _round_up(x, m):
    return (x + m - 1) // m * m


def _pick_tile_rows(r):
    """Packed-row tile size.

    Targets >=4 grid steps (>=2 per TensorCore when v7x megacore shards the
    'parallel' axis, keeping prefetch-next / writeback-prev overlapped) and
    tiles of up to 512 packed rows (= 2048 original rows; a few hundred KiB
    per buffer, far under VMEM) to amortize the ~0.35us per-grid-step cost.
    """
    t = (r // 4) // 16 * 16          # floor -> never fewer than 4 steps
    return max(16, min(512, t))


def im2col_nchw(x, kh, kw, stride, pad):
    B, C, H, W = x.shape
    xp = jnp.pad(x, ((0, 0), (0, 0), (pad, pad), (pad, pad)))
    Ho = (H + 2 * pad - kh) // stride + 1
    Wo = (W + 2 * pad - kw) // stride + 1
    cols = []
    for i in range(kh):
        for j in range(kw):
            cols.append(xp[:, :, i:i + stride * Ho:stride, j:j + stride * Wo:stride])
    # (B, C, kh*kw, Ho, Wo) -> rows are (B, Ho, Wo), features are (C, kh*kw)
    patches = jnp.stack(cols, axis=2)
    patches = patches.transpose(0, 3, 4, 1, 2).reshape(B * Ho * Wo, C * kh * kw)
    return patches, Ho, Wo


def _make_patches(images, p_padded):
    """bf16 cast (halves the XLA im2col plumbing bytes) + im2col + zero-pad."""
    patches, Ho, Wo = im2col_nchw(images.astype(jnp.bfloat16), 3, 3,
                                  stride=2, pad=1)
    patches = jnp.pad(patches, ((0, 0), (0, p_padded - patches.shape[1])))
    return patches, Ho, Wo


# ----------------------------------------------------------------------------
# Fused Pallas kernel (all operands lane-packed: 4 rows per 128-lane row):
#   conv-as-matmul + bias + ReLU                      (backbone stem)
#   -> y   = feat @ [bd(w_fc) | bd(w1)]               (one MXU push, shared LHS)
#   -> mlp = relu(y + b_cat) @ w2_pad                 (zero rows kill fc lanes)
#   -> emb = y[:, :128] + b_fc + mlp + b2
#   -> per-32-lane l2norm (segmented sum-of-squares matmul + rsqrt on EUP)
# ----------------------------------------------------------------------------
def _imgcnn_fused_kernel(patch_ref, wconv_ref, bconv_ref, wcat_ref, bcat_ref,
                         bfc_ref, w2p_ref, b2_ref, segmask_ref, o_ref,
                         *, apply_norm):
    # 1) backbone conv stem: block-diagonal im2col matmul, f32 accumulation.
    feat = jnp.dot(patch_ref[...], wconv_ref[...],
                   preferred_element_type=jnp.float32)
    feat = jnp.maximum(feat + bconv_ref[...], 0.0)

    # 2) ImgMLP head, fused on the resident packed feat tile (bf16 MXU ops).
    x = feat.astype(wcat_ref.dtype)
    y = jnp.dot(x, wcat_ref[...], preferred_element_type=jnp.float32)

    e4 = bfc_ref.shape[-1]                       # 128 = PACK * emb_dim
    fc = y[:, :e4] + bfc_ref[...]                # lane-group-aligned slice

    # Invariant: rows [0, 128) of w2p_ref are exactly zero, so the (finite)
    # garbage fc lanes of relu(y + b_cat) contribute exactly 0 to mlp.
    h = jnp.maximum(y + bcat_ref[...], 0.0).astype(w2p_ref.dtype)
    mlp = jnp.dot(h, w2p_ref[...], preferred_element_type=jnp.float32)

    emb = fc + mlp + b2_ref[...]                 # f32 epilogue (v5e-safe)
    if apply_norm:
        # segmented sum-of-squares over each packed 32-lane embedding via a
        # 0/1 block-diagonal selector; rsqrt is one EUP op in an idle slot.
        sumsq = jnp.dot(emb * emb, segmask_ref[...],
                        preferred_element_type=jnp.float32)
        emb = emb * lax.rsqrt(sumsq + 1e-8)
    o_ref[...] = emb.astype(o_ref.dtype)


def _imgcnn_fused_call(patches_packed, params, *, tile_r, apply_norm, out_dtype):
    Rp, L = patches_packed.shape                 # L == 128 (lane-dense)
    kernel = functools.partial(_imgcnn_fused_kernel, apply_norm=apply_norm)

    def full(a):  # full-array block, constant index map -> DMA'd once, resident
        return pl.BlockSpec(a.shape, lambda i: (0, 0))

    return pl.pallas_call(
        kernel,
        out_shape=jax.ShapeDtypeStruct((Rp, 128), out_dtype),
        grid_spec=pltpu.PrefetchScalarGridSpec(
            num_scalar_prefetch=0,
            grid=(Rp // tile_r,),
            in_specs=[
                pl.BlockSpec((tile_r, L), lambda i: (i, 0)),
                full(params["w_conv"]), full(params["b_conv"]),
                full(params["w_cat"]), full(params["b_cat"]),
                full(params["b_fc"]), full(params["w2_pad"]),
                full(params["b2"]), full(params["seg_mask"]),
            ],
            out_specs=pl.BlockSpec((tile_r, 128), lambda i: (i, 0)),
        ),
        compiler_params=pltpu.CompilerParams(
            dimension_semantics=("parallel",)),
    )(patches_packed, params["w_conv"], params["b_conv"], params["w_cat"],
      params["b_cat"], params["b_fc"], params["w2_pad"], params["b2"],
      params["seg_mask"])


@functools.partial(jax.jit, static_argnames=("pack", "no_imgnorm", "out_dtype"))
def _imgcnn_forward(params, images_nchw, pack, no_imgnorm=False,
                    out_dtype=jnp.float32):
    B = images_nchw.shape[0]
    lane_in = params["w_conv"].shape[0]          # pack * Pp == 128
    Pp = lane_in // pack
    E = params["b_fc"].shape[-1] // pack         # emb_dim

    patches, Ho, Wo = _make_patches(images_nchw, Pp)      # (M, Pp) bf16
    M = patches.shape[0]

    R = pl.cdiv(M, pack)
    tile_r = _pick_tile_rows(R)
    Rp = _round_up(R, tile_r)
    Mp = Rp * pack
    if Mp != M:                                  # masked-tail via zero pad
        patches = jnp.pad(patches, ((0, Mp - M), (0, 0)))
    # lane-dense packing: `pack` consecutive rows -> one 128-lane row
    patches_packed = patches.reshape(Rp, lane_in)         # free XLA reshape

    emb_packed = _imgcnn_fused_call(patches_packed, params, tile_r=tile_r,
                                    apply_norm=not no_imgnorm,
                                    out_dtype=out_dtype)  # (Rp, 128)
    # un-pack (free XLA reshape); padded tail rows are garbage-but-finite and
    # sliced off here — keep this slice and the +1e-8 eps in the kernel.
    emb = emb_packed.reshape(Mp, E)[:M]
    return emb.reshape(B, Ho * Wo, E)


# ----------------------------------------------------------------------------
# Module wrapper
# ----------------------------------------------------------------------------
class ImgCNNPallas:
    """ImgCNN: backbone conv stem + ImgMLP head, one fused lane-dense kernel."""

    def __init__(self, in_ch=3, img_dim=64, emb_dim=32, no_imgnorm=False,
                 out_dtype=jnp.float32, key=jax.random.PRNGKey(0)):
        assert 128 % emb_dim == 0, "lane packing assumes emb_dim divides 128"
        self.pack = 128 // emb_dim               # rows packed per 128-lane row
        self.in_ch = in_ch
        self.img_dim = img_dim
        self.emb_dim = emb_dim
        self.hid_dim = emb_dim // 2
        self.no_imgnorm = no_imgnorm
        self.out_dtype = out_dtype               # bf16 halves writeback bytes

        k = jax.random.split(key, 8)
        scale = 0.05
        kh = kw = 3
        P = in_ch * kh * kw
        # pad contraction dim so pack*Pp is a 128-lane-dense multiple (27->32)
        Pp = _round_up(P * self.pack, 128) // self.pack
        self.p_padded = Pp
        g = self.pack

        # ---- base (un-packed) weights, torch layouts, stored for the reference
        w_conv = scale * jax.random.normal(k[0], (img_dim, in_ch, kh, kw), jnp.float32)
        w_conv = jnp.pad(w_conv.reshape(img_dim, P).T, ((0, Pp - P), (0, 0)))  # (Pp, D)
        b_conv = scale * jax.random.normal(k[1], (1, img_dim), jnp.float32)
        w_fc = scale * jax.random.normal(k[2], (img_dim, emb_dim), jnp.float32)
        b_fc = scale * jax.random.normal(k[3], (1, emb_dim), jnp.float32)
        w1 = scale * jax.random.normal(k[4], (img_dim, self.hid_dim), jnp.float32)
        b1 = scale * jax.random.normal(k[5], (1, self.hid_dim), jnp.float32)
        w2 = scale * jax.random.normal(k[6], (self.hid_dim, emb_dim), jnp.float32)
        b2 = scale * jax.random.normal(k[7], (1, emb_dim), jnp.float32)

        self.w_conv_ref = w_conv.astype(jnp.bfloat16)
        self.b_conv = b_conv
        self.w_fc = w_fc.astype(jnp.bfloat16)
        self.b_fc = b_fc
        self.w1 = w1.astype(jnp.bfloat16)
        self.b1 = b1
        self.w2 = w2.astype(jnp.bfloat16)
        self.b2 = b2

        # ---- lane-dense packed weights: block-diagonal x `pack` copies so that
        # `pack` consecutive rows ride the 128 lanes through the whole datapath.
        eye = jnp.eye(g, dtype=jnp.float32)
        bd = lambda w: jnp.kron(eye, w)
        w_conv_bd = bd(w_conv).astype(jnp.bfloat16)                 # (128, g*D)
        b_conv_bd = jnp.tile(b_conv, (1, g))                        # (1, g*D)
        # one MXU push for the shared-LHS pair: [blockdiag(w_fc) | blockdiag(w1)]
        w_cat_bd = jnp.concatenate([bd(w_fc), bd(w1)], axis=1).astype(jnp.bfloat16)
        b_cat_bd = jnp.concatenate(
            [jnp.zeros((1, g * emb_dim), jnp.float32), jnp.tile(b1, (1, g))], axis=1)
        b_fc_bd = jnp.tile(b_fc, (1, g))                            # (1, 128)
        # INVARIANT: leading g*emb_dim rows must stay exactly zero (they absorb
        # the relu'd fc lanes of y so they contribute exactly 0 to mlp).
        w2_bd_pad = jnp.concatenate(
            [jnp.zeros((g * emb_dim, g * emb_dim), jnp.float32), bd(w2)],
            axis=0).astype(jnp.bfloat16)                            # (g*(E+H), 128)
        b2_bd = jnp.tile(b2, (1, g))                                # (1, 128)
        # 0/1 block-diag selector for the segmented (per-embedding) l2norm.
        seg_mask = jnp.kron(eye, jnp.ones((emb_dim, emb_dim), jnp.float32))

        self.params = dict(
            w_conv=w_conv_bd, b_conv=b_conv_bd,
            w_cat=w_cat_bd, b_cat=b_cat_bd, b_fc=b_fc_bd,
            w2_pad=w2_bd_pad, b2=b2_bd, seg_mask=seg_mask)

    def __call__(self, images_nchw):
        return _imgcnn_forward(self.params, images_nchw, pack=self.pack,
                               no_imgnorm=self.no_imgnorm,
                               out_dtype=self.out_dtype)

    # pure-JAX reference (same bf16 operand / f32 accumulation points)
    def reference(self, images_nchw):
        B = images_nchw.shape[0]
        patches, Ho, Wo = _make_patches(images_nchw, self.p_padded)
        feat = jnp.maximum(
            jnp.dot(patches, self.w_conv_ref, preferred_element_type=jnp.float32)
            + self.b_conv, 0.0)
        x = feat.astype(jnp.bfloat16)
        fc = jnp.dot(x, self.w_fc, preferred_element_type=jnp.float32) + self.b_fc
        h = jnp.maximum(
            jnp.dot(x, self.w1, preferred_element_type=jnp.float32) + self.b1, 0.0)
        mlp = jnp.dot(h.astype(jnp.bfloat16), self.w2,
                      preferred_element_type=jnp.float32) + self.b2
        emb = fc + mlp
        if not self.no_imgnorm:
            norm = jnp.sqrt(jnp.sum(emb * emb, axis=-1, keepdims=True)) + 1e-8
            emb = emb / norm
        return emb.reshape(B, Ho * Wo, self.emb_dim)


if __name__ == "__main__":
    key = jax.random.PRNGKey(0)
    k_img, k_params = jax.random.split(key)
    # images: NCHW, batch=2, 3 channels, 32x32 spatial (stride-2 stem -> 16x16)
    images = jax.random.normal(k_img, (2, 3, 32, 32), jnp.float32)

    model = ImgCNNPallas(in_ch=3, img_dim=64, emb_dim=32, key=k_params)

    out = jax.block_until_ready(model(images))
    ref = model.reference(images)

    assert out.shape == (2, 16 * 16, 32), out.shape
    # bf16 matmul operands on both paths; tolerance covers MXU-vs-XLA f32
    # accumulation order and the rsqrt(eps) vs sqrt()+eps epilogue difference.
    assert jnp.allclose(out.astype(jnp.float32), ref, atol=1e-3, rtol=1e-3), (
        float(jnp.max(jnp.abs(out.astype(jnp.float32) - ref))))
    print("KERNEL_OK")
</pallas_src>

<mosaic_0001>
module attributes {stable_mosaic.version = 11 : i64} {
  func.func @_imgcnn_fused_kernel(%arg0: i32, %arg1: memref<32x128xbf16, #tpu.memory_space<vmem>>, %arg2: memref<128x256xbf16, #tpu.memory_space<vmem>>, %arg3: memref<1x256xf32, #tpu.memory_space<vmem>>, %arg4: memref<256x192xbf16, #tpu.memory_space<vmem>>, %arg5: memref<1x192xf32, #tpu.memory_space<vmem>>, %arg6: memref<1x128xf32, #tpu.memory_space<vmem>>, %arg7: memref<192x128xbf16, #tpu.memory_space<vmem>>, %arg8: memref<1x128xf32, #tpu.memory_space<vmem>>, %arg9: memref<128x128xf32, #tpu.memory_space<vmem>>, %arg10: memref<32x128xf32, #tpu.memory_space<vmem>>) attributes {dimension_semantics = [#tpu.dimension_semantics<parallel>], iteration_bounds = array<i64: 4>, scalar_prefetch = 0 : i64, scratch_operands = 0 : i64, tpu.core_type = #tpu.core_type<tc>, window_params = [{transform_indices = @transform_0, window_bounds = array<i64: 32, 128>}, {pipeline_mode = #tpu.pipeline_mode<synchronous>, transform_indices = @transform_1, window_bounds = array<i64: 128, 256>}, {pipeline_mode = #tpu.pipeline_mode<synchronous>, transform_indices = @transform_2, window_bounds = array<i64: 1, 256>}, {pipeline_mode = #tpu.pipeline_mode<synchronous>, transform_indices = @transform_3, window_bounds = array<i64: 256, 192>}, {pipeline_mode = #tpu.pipeline_mode<synchronous>, transform_indices = @transform_4, window_bounds = array<i64: 1, 192>}, {pipeline_mode = #tpu.pipeline_mode<synchronous>, transform_indices = @transform_5, window_bounds = array<i64: 1, 128>}, {pipeline_mode = #tpu.pipeline_mode<synchronous>, transform_indices = @transform_6, window_bounds = array<i64: 192, 128>}, {pipeline_mode = #tpu.pipeline_mode<synchronous>, transform_indices = @transform_7, window_bounds = array<i64: 1, 128>}, {pipeline_mode = #tpu.pipeline_mode<synchronous>, transform_indices = @transform_8, window_bounds = array<i64: 128, 128>}, {transform_indices = @transform_9, window_bounds = array<i64: 32, 128>}]} {
    %c0 = arith.constant 0 : index
    %c0_0 = arith.constant 0 : index
    %0 = vector.load %arg1[%c0, %c0_0] : memref<32x128xbf16, #tpu.memory_space<vmem>>, vector<32x128xbf16>
    %c0_1 = arith.constant 0 : index
    %c0_2 = arith.constant 0 : index
    %1 = vector.load %arg2[%c0_1, %c0_2] : memref<128x256xbf16, #tpu.memory_space<vmem>>, vector<128x256xbf16>
    %cst = arith.constant dense<0.000000e+00> : vector<32x256xf32>
    %2 = tpu.matmul %0, %1, %cst {dimension_numbers = #tpu.dot_dimension_numbers<[1], [0], [0], [1], [0, 0, 1, 1], [], []>} : vector<32x128xbf16>, vector<128x256xbf16>, vector<32x256xf32> -> vector<32x256xf32>
    %c0_3 = arith.constant 0 : index
    %c0_4 = arith.constant 0 : index
    %3 = vector.load %arg3[%c0_3, %c0_4] : memref<1x256xf32, #tpu.memory_space<vmem>>, vector<1x256xf32>
    %4 = vector.broadcast %3 : vector<1x256xf32> to vector<32x256xf32>
    %5 = arith.addf %2, %4 : vector<32x256xf32>
    %cst_5 = arith.constant 0.000000e+00 : f32
    %6 = vector.broadcast %cst_5 : f32 to vector<32x256xf32>
    %7 = arith.maximumf %5, %6 : vector<32x256xf32>
    %8 = arith.truncf %7 : vector<32x256xf32> to vector<32x256xbf16>
    %c0_6 = arith.constant 0 : index
    %c0_7 = arith.constant 0 : index
    %9 = vector.load %arg4[%c0_6, %c0_7] : memref<256x192xbf16, #tpu.memory_space<vmem>>, vector<256x192xbf16>
    %cst_8 = arith.constant dense<0.000000e+00> : vector<32x192xf32>
    %10 = tpu.matmul %8, %9, %cst_8 {dimension_numbers = #tpu.dot_dimension_numbers<[1], [0], [0], [1], [0, 0, 1, 1], [], []>} : vector<32x256xbf16>, vector<256x192xbf16>, vector<32x192xf32> -> vector<32x192xf32>
    %11 = vector.extract_strided_slice %10 {offsets = [0, 0], sizes = [32, 128], strides = [1, 1]} : vector<32x192xf32> to vector<32x128xf32>
    %c0_9 = arith.constant 0 : index
    %c0_10 = arith.constant 0 : index
    %12 = vector.load %arg6[%c0_9, %c0_10] : memref<1x128xf32, #tpu.memory_space<vmem>>, vector<1x128xf32>
    %13 = vector.broadcast %12 : vector<1x128xf32> to vector<32x128xf32>
    %14 = arith.addf %11, %13 : vector<32x128xf32>
    %c0_11 = arith.constant 0 : index
    %c0_12 = arith.constant 0 : index
    %15 = vector.load %arg5[%c0_11, %c0_12] : memref<1x192xf32, #tpu.memory_space<vmem>>, vector<1x192xf32>
    %16 = vector.broadcast %15 : vector<1x192xf32> to vector<32x192xf32>
    %17 = arith.addf %10, %16 : vector<32x192xf32>
    %cst_13 = arith.constant 0.000000e+00 : f32
    %18 = vector.broadcast %cst_13 : f32 to vector<32x192xf32>
    %19 = arith.maximumf %17, %18 : vector<32x192xf32>
    %20 = arith.truncf %19 : vector<32x192xf32> to vector<32x192xbf16>
    %c0_14 = arith.constant 0 : index
    %c0_15 = arith.constant 0 : index
    %21 = vector.load %arg7[%c0_14, %c0_15] : memref<192x128xbf16, #tpu.memory_space<vmem>>, vector<192x128xbf16>
    %cst_16 = arith.constant dense<0.000000e+00> : vector<32x128xf32>
    %22 = tpu.matmul %20, %21, %cst_16 {dimension_numbers = #tpu.dot_dimension_numbers<[1], [0], [0], [1], [0, 0, 1, 1], [], []>} : vector<32x192xbf16>, vector<192x128xbf16>, vector<32x128xf32> -> vector<32x128xf32>
    %23 = arith.addf %14, %22 : vector<32x128xf32>
    %c0_17 = arith.constant 0 : index
    %c0_18 = arith.constant 0 : index
    %24 = vector.load %arg8[%c0_17, %c0_18] : memref<1x128xf32, #tpu.memory_space<vmem>>, vector<1x128xf32>
    %25 = vector.broadcast %24 : vector<1x128xf32> to vector<32x128xf32>
    %26 = arith.addf %23, %25 : vector<32x128xf32>
    %27 = arith.mulf %26, %26 : vector<32x128xf32>
    %c0_19 = arith.constant 0 : index
    %c0_20 = arith.constant 0 : index
    %28 = vector.load %arg9[%c0_19, %c0_20] : memref<128x128xf32, #tpu.memory_space<vmem>>, vector<128x128xf32>
    %cst_21 = arith.constant dense<0.000000e+00> : vector<32x128xf32>
    %29 = tpu.matmul %27, %28, %cst_21 {dimension_numbers = #tpu.dot_dimension_numbers<[1], [0], [0], [1], [0, 0, 1, 1], [], []>} : vector<32x128xf32>, vector<128x128xf32>, vector<32x128xf32> -> vector<32x128xf32>
    %cst_22 = arith.constant 9.99999993E-9 : f32
    %30 = vector.broadcast %cst_22 : f32 to vector<32x128xf32>
    %31 = arith.addf %29, %30 : vector<32x128xf32>
    %32 = math.rsqrt %31 : vector<32x128xf32>
    %33 = arith.mulf %26, %32 : vector<32x128xf32>
    %c0_23 = arith.constant 0 : index
    %c0_24 = arith.constant 0 : index
    %34 = vector.load %arg10[%c0_23, %c0_24] : memref<32x128xf32, #tpu.memory_space<vmem>>, vector<32x128xf32>
    tpu.vector_store %arg10[%c0_23, %c0_24], %33 {strides = array<i32>} : memref<32x128xf32, #tpu.memory_space<vmem>>, vector<32x128xf32>,
    return
  }
  func.func @transform_0(%arg0: i32) -> (i32, i32) {
    %c0_i32 = arith.constant 0 : i32
    %c0_i32_0 = arith.constant 0 : i32
    return %arg0, %c0_i32 : i32, i32
  }
  func.func @transform_1(%arg0: i32) -> (i32, i32) {
    %c0_i32 = arith.constant 0 : i32
    %c0_i32_0 = arith.constant 0 : i32
    %c0_i32_1 = arith.constant 0 : i32
    return %c0_i32, %c0_i32_0 : i32, i32
  }
  func.func @transform_2(%arg0: i32) -> (i32, i32) {
    %c0_i32 = arith.constant 0 : i32
    %c0_i32_0 = arith.constant 0 : i32
    %c0_i32_1 = arith.constant 0 : i32
    return %c0_i32, %c0_i32_0 : i32, i32
  }
  func.func @transform_3(%arg0: i32) -> (i32, i32) {
    %c0_i32 = arith.constant 0 : i32
    %c0_i32_0 = arith.constant 0 : i32
    %c0_i32_1 = arith.constant 0 : i32
    return %c0_i32, %c0_i32_0 : i32, i32
  }
  func.func @transform_4(%arg0: i32) -> (i32, i32) {
    %c0_i32 = arith.constant 0 : i32
    %c0_i32_0 = arith.constant 0 : i32
    %c0_i32_1 = arith.constant 0 : i32
    return %c0_i32, %c0_i32_0 : i32, i32
  }
  func.func @transform_5(%arg0: i32) -> (i32, i32) {
    %c0_i32 = arith.constant 0 : i32
    %c0_i32_0 = arith.constant 0 : i32
    %c0_i32_1 = arith.constant 0 : i32
    return %c0_i32, %c0_i32_0 : i32, i32
  }
  func.func @transform_6(%arg0: i32) -> (i32, i32) {
    %c0_i32 = arith.constant 0 : i32
    %c0_i32_0 = arith.constant 0 : i32
    %c0_i32_1 = arith.constant 0 : i32
    return %c0_i32, %c0_i32_0 : i32, i32
  }
  func.func @transform_7(%arg0: i32) -> (i32, i32) {
    %c0_i32 = arith.constant 0 : i32
    %c0_i32_0 = arith.constant 0 : i32
    %c0_i32_1 = arith.constant 0 : i32
    return %c0_i32, %c0_i32_0 : i32, i32
  }
  func.func @transform_8(%arg0: i32) -> (i32, i32) {
    %c0_i32 = arith.constant 0 : i32
    %c0_i32_0 = arith.constant 0 : i32
    %c0_i32_1 = arith.constant 0 : i32
    return %c0_i32, %c0_i32_0 : i32, i32
  }
  func.func @transform_9(%arg0: i32) -> (i32, i32) {
    %c0_i32 = arith.constant 0 : i32
    %c0_i32_0 = arith.constant 0 : i32
    return %arg0, %c0_i32 : i32, i32
  }
}

</mosaic_0001>

<llo_original>
// kernel: _imgcnn_forward.1
$region0: #{_imgcnn_forward.1}
  #allocation0 [shape = 'u32[]', space=smem, size = 0x4, offset = 0x4, fixed_abs, tag = 'smem constant byte address 0x4 - core index']
  #allocation1 [shape = 'u32[144,128]{1,0:T(1,128)}', space=vmem, size = 0x12000, scoped, tag = 'internal scratch']
  %s0 = inlined_call_operand.vmem [shape: bf16[128,128], index: 0, kind: input, shape index: {}]
  %s1 = inlined_call_operand.vmem [shape: bf16[128,256], index: 1, kind: input, shape index: {}]
  %s2 = inlined_call_operand.vmem [shape: f32[1,256], index: 2, kind: input, shape index: {}]
  %s3 = inlined_call_operand.vmem [shape: bf16[256,192], index: 3, kind: input, shape index: {}]
  %s4 = inlined_call_operand.vmem [shape: f32[1,192], index: 4, kind: input, shape index: {}]
  %s5 = inlined_call_operand.vmem [shape: f32[1,128], index: 5, kind: input, shape index: {}]
  %s6 = inlined_call_operand.vmem [shape: bf16[192,128], index: 6, kind: input, shape index: {}]
  %s7 = inlined_call_operand.vmem [shape: f32[1,128], index: 7, kind: input, shape index: {}]
  %s8 = inlined_call_operand.vmem [shape: f32[128,128], index: 8, kind: input, shape index: {}]
  %s9 = inlined_call_operand.vmem [shape: f32[128,128], index: 9, kind: output, shape index: {}]
  %s10 = sld [smem:[#allocation0]]
  $region69: #{_imgcnn_forward.1} parent=0
    _
  %s12 = ssub.s32 1, %s10
  %s13 = scalar_select 0, %s12, %s10
  loop: start=0, step=1, limit=6
  $region2: #{_imgcnn_forward.1} parent=0 // loop_pre_header
    _
  $region3: #{_imgcnn_forward.1} parent=0 // loop_header
    %s15 = sphi 0, %s19
    %p16 = scmp.ge.s32.totalorder %s15, 6
    %s25 = sphi 0, %s27
    %s28 = sphi 0, %s25
    %s29 = sphi 0, %s28
    %s45 = sphi 0, %s29
    %s49 = sphi 0, %s49
    %s51 = sphi 0, %s49
    %s52 = sphi 0, %s51
    %s66 = sphi 0, %s52
    %s70 = sphi 0, %s70
    %s72 = sphi 0, %s70
    %s73 = sphi 0, %s72
    %s87 = sphi 0, %s73
    %s91 = sphi 0, %s91
    %s93 = sphi 0, %s91
    %s94 = sphi 0, %s93
    %s108 = sphi 0, %s94
    %s112 = sphi 0, %s112
    %s114 = sphi 0, %s112
    %s115 = sphi 0, %s114
    %s129 = sphi 0, %s115
    %s133 = sphi 0, %s133
    %s135 = sphi 0, %s133
    %s136 = sphi 0, %s135
    %s150 = sphi 0, %s136
    %s154 = sphi 0, %s154
    %s156 = sphi 0, %s154
    %s157 = sphi 0, %s156
    %s171 = sphi 0, %s157
    %s175 = sphi 0, %s175
    %s177 = sphi 0, %s175
    %s178 = sphi 0, %s177
    %s192 = sphi 0, %s178
    %s196 = sphi 0, %s196
    %s198 = sphi 0, %s196
    %s199 = sphi 0, %s198
    %s213 = sphi 0, %s199
    %s219 = sphi 0, %s221
    %s222 = sphi 0, %s219
    %s223 = sphi 0, %s222
    %s239 = sphi 0, %s223
  $region4: #{_imgcnn_forward.1} parent=0 // loop_header_branch
    %18 = sbr.rel (%p16) target = $region8
  $region5: #{_imgcnn_forward.1} parent=0 // loop_body
    %s20 = ssub.s32 %s15, 1
    %s21 = ssub.s32 %s15, 2
    %s22 = sadd.s32 %s15, 1
    %s23 = ssub.s32 %s15, %s22
    %p24 = scmp.eq.s32.totalorder %s23, 0
    %s26 = sadd.s32 %s25, 1
    %s27 = scalar_select %p24, %s25, %s26
    %p30 = pneg %p24
    %p31 = scmp.eq.s32.totalorder %s15, 3
    %p32 = por %p30, %p31
    %p33 = scmp.ne.s32.totalorder %s25, %s28
    %p34 = scmp.eq.s32.totalorder %s15, 0
    %p35 = por %p33, %p34
    %p36 = scmp.ne.s32.totalorder %s25, %s28
    %p37 = scmp.eq.s32.totalorder %s20, 3
    %p38 = por %p36, %p37
    %p39 = scmp.ne.s32.totalorder %s28, %s29
    %p40 = scmp.eq.s32.totalorder %s20, 0
    %p41 = por %p39, %p40
    %p42 = scmp.ne.s32.totalorder %s28, %s29
    %p43 = scmp.eq.s32.totalorder %s21, 3
    %p44 = por %p42, %p43
    %p46 = scmp.ne.s32.totalorder %s29, %s45
    %p47 = scmp.eq.s32.totalorder %s21, 0
    %p48 = por %p46, %p47
    %s50 = sadd.s32 %s49, 1
    %p53 = scmp.eq.s32.totalorder %s15, 3
    %p54 = scmp.ne.s32.totalorder %s49, %s51
    %p55 = scmp.eq.s32.totalorder %s15, 0
    %p56 = por %p54, %p55
    %p57 = scmp.ne.s32.totalorder %s49, %s51
    %p58 = scmp.eq.s32.totalorder %s20, 3
    %p59 = por %p57, %p58
    %p60 = scmp.ne.s32.totalorder %s51, %s52
    %p61 = scmp.eq.s32.totalorder %s20, 0
    %p62 = por %p60, %p61
    %p63 = scmp.ne.s32.totalorder %s51, %s52
    %p64 = scmp.eq.s32.totalorder %s21, 3
    %p65 = por %p63, %p64
    %p67 = scmp.ne.s32.totalorder %s52, %s66
    %p68 = scmp.eq.s32.totalorder %s21, 0
    %p69 = por %p67, %p68
    %s71 = sadd.s32 %s70, 1
    %p74 = scmp.eq.s32.totalorder %s15, 3
    %p75 = scmp.ne.s32.totalorder %s70, %s72
    %p76 = scmp.eq.s32.totalorder %s15, 0
    %p77 = por %p75, %p76
    %p78 = scmp.ne.s32.totalorder %s70, %s72
    %p79 = scmp.eq.s32.totalorder %s20, 3
    %p80 = por %p78, %p79
    %p81 = scmp.ne.s32.totalorder %s72, %s73
    %p82 = scmp.eq.s32.totalorder %s20, 0
    %p83 = por %p81, %p82
    %p84 = scmp.ne.s32.totalorder %s72, %s73
    %p85 = scmp.eq.s32.totalorder %s21, 3
    %p86 = por %p84, %p85
    %p88 = scmp.ne.s32.totalorder %s73, %s87
    %p89 = scmp.eq.s32.totalorder %s21, 0
    %p90 = por %p88, %p89
    %s92 = sadd.s32 %s91, 1
    %p95 = scmp.eq.s32.totalorder %s15, 3
    %p96 = scmp.ne.s32.totalorder %s91, %s93
    %p97 = scmp.eq.s32.totalorder %s15, 0
    %p98 = por %p96, %p97
    %p99 = scmp.ne.s32.totalorder %s91, %s93
    %p100 = scmp.eq.s32.totalorder %s20, 3
    %p101 = por %p99, %p100
    %p102 = scmp.ne.s32.totalorder %s93, %s94
    %p103 = scmp.eq.s32.totalorder %s20, 0
    %p104 = por %p102, %p103
    %p105 = scmp.ne.s32.totalorder %s93, %s94
    %p106 = scmp.eq.s32.totalorder %s21, 3
    %p107 = por %p105, %p106
    %p109 = scmp.ne.s32.totalorder %s94, %s108
    %p110 = scmp.eq.s32.totalorder %s21, 0
    %p111 = por %p109, %p110
    %s113 = sadd.s32 %s112, 1
    %p116 = scmp.eq.s32.totalorder %s15, 3
    %p117 = scmp.ne.s32.totalorder %s112, %s114
    %p118 = scmp.eq.s32.totalorder %s15, 0
    %p119 = por %p117, %p118
    %p120 = scmp.ne.s32.totalorder %s112, %s114
    %p121 = scmp.eq.s32.totalorder %s20, 3
    %p122 = por %p120, %p121
    %p123 = scmp.ne.s32.totalorder %s114, %s115
    %p124 = scmp.eq.s32.totalorder %s20, 0
    %p125 = por %p123, %p124
    %p126 = scmp.ne.s32.totalorder %s114, %s115
    %p127 = scmp.eq.s32.totalorder %s21, 3
    %p128 = por %p126, %p127
    %p130 = scmp.ne.s32.totalorder %s115, %s129
    %p131 = scmp.eq.s32.totalorder %s21, 0
    %p132 = por %p130, %p131
    %s134 = sadd.s32 %s133, 1
    %p137 = scmp.eq.s32.totalorder %s15, 3
    %p138 = scmp.ne.s32.totalorder %s133, %s135
    %p139 = scmp.eq.s32.totalorder %s15, 0
    %p140 = por %p138, %p139
    %p141 = scmp.ne.s32.totalorder %s133, %s135
    %p142 = scmp.eq.s32.totalorder %s20, 3
    %p143 = por %p141, %p142
    %p144 = scmp.ne.s32.totalorder %s135, %s136
    %p145 = scmp.eq.s32.totalorder %s20, 0
    %p146 = por %p144, %p145
    %p147 = scmp.ne.s32.totalorder %s135, %s136
    %p148 = scmp.eq.s32.totalorder %s21, 3
    %p149 = por %p147, %p148
    %p151 = scmp.ne.s32.totalorder %s136, %s150
    %p152 = scmp.eq.s32.totalorder %s21, 0
    %p153 = por %p151, %p152
    %s155 = sadd.s32 %s154, 1
    %p158 = scmp.eq.s32.totalorder %s15, 3
    %p159 = scmp.ne.s32.totalorder %s154, %s156
    %p160 = scmp.eq.s32.totalorder %s15, 0
    %p161 = por %p159, %p160
    %p162 = scmp.ne.s32.totalorder %s154, %s156
    %p163 = scmp.eq.s32.totalorder %s20, 3
    %p164 = por %p162, %p163
    %p165 = scmp.ne.s32.totalorder %s156, %s157
    %p166 = scmp.eq.s32.totalorder %s20, 0
    %p167 = por %p165, %p166
    %p168 = scmp.ne.s32.totalorder %s156, %s157
    %p169 = scmp.eq.s32.totalorder %s21, 3
    %p170 = por %p168, %p169
    %p172 = scmp.ne.s32.totalorder %s157, %s171
    %p173 = scmp.eq.s32.totalorder %s21, 0
    %p174 = por %p172, %p173
    %s176 = sadd.s32 %s175, 1
    %p179 = scmp.eq.s32.totalorder %s15, 3
    %p180 = scmp.ne.s32.totalorder %s175, %s177
    %p181 = scmp.eq.s32.totalorder %s15, 0
    %p182 = por %p180, %p181
    %p183 = scmp.ne.s32.totalorder %s175, %s177
    %p184 = scmp.eq.s32.totalorder %s20, 3
    %p185 = por %p183, %p184
    %p186 = scmp.ne.s32.totalorder %s177, %s178
    %p187 = scmp.eq.s32.totalorder %s20, 0
    %p188 = por %p186, %p187
    %p189 = scmp.ne.s32.totalorder %s177, %s178
    %p190 = scmp.eq.s32.totalorder %s21, 3
    %p191 = por %p189, %p190
    %p193 = scmp.ne.s32.totalorder %s178, %s192
    %p194 = scmp.eq.s32.totalorder %s21, 0
    %p195 = por %p193, %p194
    %s197 = sadd.s32 %s196, 1
    %p200 = scmp.eq.s32.totalorder %s15, 3
    %p201 = scmp.ne.s32.totalorder %s196, %s198
    %p202 = scmp.eq.s32.totalorder %s15, 0
    %p203 = por %p201, %p202
    %p204 = scmp.ne.s32.totalorder %s196, %s198
    %p205 = scmp.eq.s32.totalorder %s20, 3
    %p206 = por %p204, %p205
    %p207 = scmp.ne.s32.totalorder %s198, %s199
    %p208 = scmp.eq.s32.totalorder %s20, 0
    %p209 = por %p207, %p208
    %p210 = scmp.ne.s32.totalorder %s198, %s199
    %p211 = scmp.eq.s32.totalorder %s21, 3
    %p212 = por %p210, %p211
    %p214 = scmp.ne.s32.totalorder %s199, %s213
    %p215 = scmp.eq.s32.totalorder %s21, 0
    %p216 = por %p214, %p215
    %s217 = ssub.s32 %s15, %s22
    %p218 = scmp.eq.s32.totalorder %s217, 0
    %s220 = sadd.s32 %s219, 1
    %s221 = scalar_select %p218, %s219, %s220
    %p224 = pneg %p218
    %p225 = scmp.eq.s32.totalorder %s15, 3
    %p226 = por %p224, %p225
    %p227 = scmp.ne.s32.totalorder %s219, %s222
    %p228 = scmp.eq.s32.totalorder %s15, 0
    %p229 = por %p227, %p228
    %p230 = scmp.ne.s32.totalorder %s219, %s222
    %p231 = scmp.eq.s32.totalorder %s20, 3
    %p232 = por %p230, %p231
    %p233 = scmp.ne.s32.totalorder %s222, %s223
    %p234 = scmp.eq.s32.totalorder %s20, 0
    %p235 = por %p233, %p234
    %p236 = scmp.ne.s32.totalorder %s222, %s223
    %p237 = scmp.eq.s32.totalorder %s21, 3
    %p238 = por %p236, %p237
    %p240 = scmp.ne.s32.totalorder %s223, %s239
    %p241 = scmp.eq.s32.totalorder %s21, 0
    %p242 = por %p240, %p241
    %p243 = scmp.le.s32.totalorder 1, %s15
    %p244 = scmp.lt.s32.totalorder %s15, 5
    %p245 = pnand %p243, %p244
    %p246 = pneg %p245
    // Predicated region
    $region9: #{_imgcnn_forward.1} parent=5 // pred_check
      _
    $region10: #{_imgcnn_forward.1} parent=5 // pred_check_branch
      %248 = sbr.rel (%p245) target = $region12
    $region11: #{_imgcnn_forward.1} parent=5 // pred_region
      %s249 = ssub.s32 %s15, 1
      // Predicated region
      $region13: #{_imgcnn_forward.1} parent=11 // pred_check
        %p250 = pneg %p62
      $region14: #{_imgcnn_forward.1} parent=11 // pred_check_branch
        %252 = sbr.rel (%p250) target = $region16
      $region15: #{_imgcnn_forward.1} parent=11 // pred_region
        _
      $region16: #{_imgcnn_forward.1} parent=11 // pred_fallthru
        _
      // Predicated region
      $region17: #{_imgcnn_forward.1} parent=11 // pred_check
        %p253 = pneg %p83
      $region18: #{_imgcnn_forward.1} parent=11 // pred_check_branch
        %255 = sbr.rel (%p253) target = $region20
      $region19: #{_imgcnn_forward.1} parent=11 // pred_region
        _
      $region20: #{_imgcnn_forward.1} parent=11 // pred_fallthru
        _
      // Predicated region
      $region21: #{_imgcnn_forward.1} parent=11 // pred_check
        %p256 = pneg %p104
      $region22: #{_imgcnn_forward.1} parent=11 // pred_check_branch
        %258 = sbr.rel (%p256) target = $region24
      $region23: #{_imgcnn_forward.1} parent=11 // pred_region
        _
      $region24: #{_imgcnn_forward.1} parent=11 // pred_fallthru
        _
      // Predicated region
      $region25: #{_imgcnn_forward.1} parent=11 // pred_check
        %p259 = pneg %p125
      $region26: #{_imgcnn_forward.1} parent=11 // pred_check_branch
        %261 = sbr.rel (%p259) target = $region28
      $region27: #{_imgcnn_forward.1} parent=11 // pred_region
        _
      $region28: #{_imgcnn_forward.1} parent=11 // pred_fallthru
        _
      // Predicated region
      $region29: #{_imgcnn_forward.1} parent=11 // pred_check
        %p262 = pneg %p146
      $region30: #{_imgcnn_forward.1} parent=11 // pred_check_branch
        %264 = sbr.rel (%p262) target = $region32
      $region31: #{_imgcnn_forward.1} parent=11 // pred_region
        _
      $region32: #{_imgcnn_forward.1} parent=11 // pred_fallthru
        _
      // Predicated region
      $region33: #{_imgcnn_forward.1} parent=11 // pred_check
        %p265 = pneg %p167
      $region34: #{_imgcnn_forward.1} parent=11 // pred_check_branch
        %267 = sbr.rel (%p265) target = $region36
      $region35: #{_imgcnn_forward.1} parent=11 // pred_region
        _
      $region36: #{_imgcnn_forward.1} parent=11 // pred_fallthru
        _
      // Predicated region
      $region37: #{_imgcnn_forward.1} parent=11 // pred_check
        %p268 = pneg %p188
      $region38: #{_imgcnn_forward.1} parent=11 // pred_check_branch
        %270 = sbr.rel (%p268) target = $region40
      $region39: #{_imgcnn_forward.1} parent=11 // pred_region
        _
      $region40: #{_imgcnn_forward.1} parent=11 // pred_fallthru
        _
      // Predicated region
      $region41: #{_imgcnn_forward.1} parent=11 // pred_check
        %p271 = pneg %p209
      $region42: #{_imgcnn_forward.1} parent=11 // pred_check_branch
        %273 = sbr.rel (%p271) target = $region44
      $region43: #{_imgcnn_forward.1} parent=11 // pred_region
        _
      $region44: #{_imgcnn_forward.1} parent=11 // pred_fallthru
        _
    $region12: #{_imgcnn_forward.1} parent=5 // pred_fallthru
      _
    %p274 = scmp.lt.s32.totalorder %s15, 4
    // Predicated region
    $region45: #{_imgcnn_forward.1} parent=5 // pred_check
      %p275 = pneg %p274
    $region46: #{_imgcnn_forward.1} parent=5 // pred_check_branch
      %277 = sbr.rel (%p275) target = $region48
    $region47: #{_imgcnn_forward.1} parent=5 // pred_region
      // Predicated region
      $region49: #{_imgcnn_forward.1} parent=47 // pred_check
        %p278 = pneg %p35
      $region50: #{_imgcnn_forward.1} parent=47 // pred_check_branch
        %280 = sbr.rel (%p278) target = $region52
      $region51: #{_imgcnn_forward.1} parent=47 // pred_region
        %s281 = smul.u32 4, %s15
        %p282 = scmp.lt.s32.totalorder %s281, 15
        %s283 = scalar_select %p282, %s281, 15
        %s284 = smul.addr %s283, 4
        %s285 = scalar_lea.vmem %s0, %s284
        %s286 = smul.u32 4, %s15
      $region52: #{_imgcnn_forward.1} parent=47 // pred_fallthru
        _
    $region48: #{_imgcnn_forward.1} parent=5 // pred_fallthru
      _
    %p287 = scmp.le.s32.totalorder 1, %s15
    %p288 = scmp.lt.s32.totalorder %s15, 5
    %p289 = pnand %p287, %p288
    %p290 = pneg %p289
    // Predicated region
    $region53: #{_imgcnn_forward.1} parent=5 // pred_check
      _
    $region54: #{_imgcnn_forward.1} parent=5 // pred_check_branch
      %292 = sbr.rel (%p289) target = $region56
    $region55: #{_imgcnn_forward.1} parent=5 // pred_region
      %s293 = ssub.s32 %s15, 1
      %s294 = smul.u32 4, %s20
      %p295 = scmp.lt.s32.totalorder %s294, 15
      %s296 = scalar_select %p295, %s294, 15
      %s297 = smul.addr %s296, 4
      %s298 = scalar_lea.vmem %s0, %s297
      %p299 = pneg %p41
      %p300 = pneg %p38
      %p301 = pneg %p62
      %p302 = pneg %p59
      %p303 = pneg %p83
      %p304 = pneg %p80
      %p305 = pneg %p104
      %p306 = pneg %p101
      %p307 = pneg %p125
      %p308 = pneg %p122
      %p309 = pneg %p146
      %p310 = pneg %p143
      %p311 = pneg %p167
      %p312 = pneg %p164
      %p313 = pneg %p188
      %p314 = pneg %p185
      %p315 = pneg %p209
      %p316 = pneg %p206
      %p317 = pneg %p235
      %p318 = pneg %p232
      %s319 = smul.u32 4, %s20
      %p320 = scmp.lt.s32.totalorder %s319, 15
      %s321 = scalar_select %p320, %s319, 15
      %s322 = smul.addr %s321, 8
      %s323 = scalar_lea.vmem %s9, %s322
      %s324 = smul.u32 4, %s20
      %p325 = scmp.lt.s32.totalorder %s324, 15
      %s326 = scalar_select %p325, %s324, 15
      %s327 = smul.addr %s326, 4
      %s328 = scalar_lea.vmem %s0, %s327
      %s329 = smul.u32 4, %s20
      %s330 = smul.u32 4, %s20
      %p331 = scmp.lt.s32.totalorder %s330, 15
      %s332 = scalar_select %p331, %s330, 15
      %s333 = smul.addr %s332, 8
      %s334 = scalar_lea.vmem %s9, %s333
      %s335 = smul.u32 4, %s20
      %v337 = vld [vmem:[%s328] sm:$0xf]
      %v338 = vld [vmem:[%s328 + $0x4] sm:$0xf]
      %v339 = vld [vmem:[%s328 + $0x8] sm:$0xf]
      %v340 = vld [vmem:[%s328 + $0xc] sm:$0xf]
      %v341 = vld [vmem:[%s1] sm:$0xff]
      %v342 = vld [vmem:[%s1 + $0x8] sm:$0xff]
      %v343 = vld [vmem:[%s1 + $0x10] sm:$0xff]
      %v344 = vld [vmem:[%s1 + $0x18] sm:$0xff]
      %v345 = vld [vmem:[%s1 + $0x20] sm:$0xff]
      %v346 = vld [vmem:[%s1 + $0x28] sm:$0xff]
      %v347 = vld [vmem:[%s1 + $0x30] sm:$0xff]
      %v348 = vld [vmem:[%s1 + $0x38] sm:$0xff]
      %v349 = vld [vmem:[%s1 + $0x40] sm:$0xff]
      %v350 = vld [vmem:[%s1 + $0x48] sm:$0xff]
      %v351 = vld [vmem:[%s1 + $0x50] sm:$0xff]
      %v352 = vld [vmem:[%s1 + $0x58] sm:$0xff]
      %v353 = vld [vmem:[%s1 + $0x60] sm:$0xff]
      %v354 = vld [vmem:[%s1 + $0x68] sm:$0xff]
      %v355 = vld [vmem:[%s1 + $0x70] sm:$0xff]
      %v356 = vld [vmem:[%s1 + $0x78] sm:$0xff]
      %v357 = vld [vmem:[%s2] sm:$0x3]
      %v359 = vlaneseq
      %v360 = vshrl.u32 %v359, 7
      %v361 = vsub.s32 0, %v360
      %v362 = vrot.slane %v357, %v361
      %v363 = vlaneseq
      %v364 = vshrl.u32 %v363, 7
      %v365 = vsub.s32 1, %v364
      %v366 = vrot.slane %v357, %v365
      %v373 = vunpack.c.l.b16 %v337
      %v374 = vunpack.c.l.b16 %v338
      %v375 = vunpack.c.l.b16 %v339
      %v376 = vunpack.c.l.b16 %v340
      %v377 = vpack.c.b16 %v374, %v373
      %v378 = vpack.c.b16 %v376, %v375
      %v397 = vunpack.c.l.b16 %v341
      %v398 = vunpack.c.h.b16 %v341
      %v399 = vunpack.c.l.b16 %v342
      %v400 = vunpack.c.h.b16 %v342
      %v401 = vunpack.c.l.b16 %v343
      %v402 = vunpack.c.h.b16 %v343
      %v403 = vunpack.c.l.b16 %v344
      %v404 = vunpack.c.h.b16 %v344
      %v405 = vunpack.c.l.b16 %v345
      %v406 = vunpack.c.h.b16 %v345
      %v407 = vunpack.c.l.b16 %v346
      %v408 = vunpack.c.h.b16 %v346
      %v409 = vunpack.c.l.b16 %v347
      %v410 = vunpack.c.h.b16 %v347
      %v411 = vunpack.c.l.b16 %v348
      %v412 = vunpack.c.h.b16 %v348
      %v413 = vunpack.c.l.b16 %v349
      %v414 = vunpack.c.h.b16 %v349
      %v415 = vunpack.c.l.b16 %v350
      %v416 = vunpack.c.h.b16 %v350
      %v417 = vunpack.c.l.b16 %v351
      %v418 = vunpack.c.h.b16 %v351
      %v419 = vunpack.c.l.b16 %v352
      %v420 = vunpack.c.h.b16 %v352
      %v421 = vunpack.c.l.b16 %v353
      %v422 = vunpack.c.h.b16 %v353
      %v423 = vunpack.c.l.b16 %v354
      %v424 = vunpack.c.h.b16 %v354
      %v425 = vunpack.c.l.b16 %v355
      %v426 = vunpack.c.h.b16 %v355
      %v427 = vunpack.c.l.b16 %v356
      %v428 = vunpack.c.h.b16 %v356
      %v429 = vpack.c.b16 %v399, %v397
      %v430 = vpack.c.b16 %v400, %v398
      %v431 = vpack.c.b16 %v403, %v401
      %v432 = vpack.c.b16 %v404, %v402
      %v433 = vpack.c.b16 %v407, %v405
      %v434 = vpack.c.b16 %v408, %v406
      %v435 = vpack.c.b16 %v411, %v409
      %v436 = vpack.c.b16 %v412, %v410
      %v437 = vpack.c.b16 %v415, %v413
      %v438 = vpack.c.b16 %v416, %v414
      %v439 = vpack.c.b16 %v419, %v417
      %v440 = vpack.c.b16 %v420, %v418
      %v441 = vpack.c.b16 %v423, %v421
      %v442 = vpack.c.b16 %v424, %v422
      %v443 = vpack.c.b16 %v427, %v425
      %v444 = vpack.c.b16 %v428, %v426
      %461 = vmatprep.subr.bf16.mxu0 %v430
      %462 = vmatpush1.bf16.msra.mxu0 %v429
      %463 = vmatprep.subr.bf16.mxu0 %v432
      %464 = vmatpush1.bf16.msra.mxu0 %v431
      %465 = vmatprep.subr.bf16.mxu0 %v434
      %466 = vmatpush1.bf16.msra.mxu0 %v433
      %467 = vmatprep.subr.bf16.mxu0 %v436
      %468 = vmatpush1.bf16.msra.mxu0 %v435
      %469 = vmatprep.subr.bf16.mxu0 %v438
      %470 = vmatpush1.bf16.msra.mxu0 %v437
      %471 = vmatprep.subr.bf16.mxu0 %v440
      %472 = vmatpush1.bf16.msra.mxu0 %v439
      %473 = vmatprep.subr.bf16.mxu0 %v442
      %474 = vmatpush1.bf16.msra.mxu0 %v441
      %475 = vmatprep.subr.bf16.mxu0 %v444
      %476 = vmatpush1.bf16.msra.mxu0 %v443
      %477 = vmatprep.subr.bf16.mxu0 0
      %478 = vmatpush1.bf16.msra.mxu0 0
      %479 = vmatprep.subr.bf16.mxu0 0
      %480 = vmatpush1.bf16.msra.mxu0 0
      %481 = vmatprep.subr.bf16.mxu0 0
      %482 = vmatpush1.bf16.msra.mxu0 0
      %483 = vmatprep.subr.bf16.mxu0 0
      %484 = vmatpush1.bf16.msra.mxu0 0
      %485 = vmatprep.subr.bf16.mxu0 0
      %486 = vmatpush1.bf16.msra.mxu0 0
      %487 = vmatprep.subr.bf16.mxu0 0
      %488 = vmatpush1.bf16.msra.mxu0 0
      %489 = vmatprep.subr.bf16.mxu0 0
      %490 = vmatpush1.bf16.msra.mxu0 0
      %491 = vmatprep.subr.bf16.mxu0 0
      %492 = vmatpush1.bf16.msra.mxu0 0
      %493 = vmatprep.mubr.bf16.mxu0 0
      %494 = vmatmul.mubr.bf16.gmra.mrb[0].mxu0 %v377
      %v495 = vpop.f32.mrb[0].mxu0
      %v496 = vadd.f32 %v362, %v495
      %v497 = vpop.f32.mrb[0].mxu0
      %v498 = vadd.f32 %v366, %v497
      %v499 = vpop.f32.mrb[0].mxu0
      %v500 = vadd.f32 %v362, %v499
      %v501 = vpop.f32.mrb[0].mxu0
      %v502 = vadd.f32 %v366, %v501
      %503 = vmatprep.mubr.bf16.mxu0 0
      %504 = vmatmul.mubr.bf16.gmra.mrb[0].mxu0 %v378
      %v505 = vpop.f32.mrb[0].mxu0
      %v506 = vadd.f32 %v362, %v505
      %v507 = vpop.f32.mrb[0].mxu0
      %v508 = vadd.f32 %v366, %v507
      %v509 = vpop.f32.mrb[0].mxu0
      %v510 = vadd.f32 %v362, %v509
      %v511 = vpop.f32.mrb[0].mxu0
      %v512 = vadd.f32 %v366, %v511
      %513 = vdwg.mxu0
      %v514 = vmax.f32 %v496, 0.0
      %v515 = vmax.f32 %v498, 0.0
      %v516 = vmax.f32 %v500, 0.0
      %v517 = vmax.f32 %v502, 0.0
      %v518 = vmax.f32 %v506, 0.0
      %v519 = vmax.f32 %v508, 0.0
      %v520 = vmax.f32 %v510, 0.0
      %v521 = vmax.f32 %v512, 0.0
      %v522 = vpack.c.bf16 %v516, %v514
      %v523 = vpack.c.bf16 %v517, %v515
      %v524 = vpack.c.bf16 %v520, %v518
      %v525 = vpack.c.bf16 %v521, %v519
      %v526 = vld [vmem:[%s3] sm:$0xff]
      %v527 = vld [vmem:[%s3 + $0x8] sm:$0xff]
      %v528 = vld [vmem:[%s3 + $0x10] sm:$0xff]
      %v529 = vld [vmem:[%s3 + $0x18] sm:$0xff]
      %v530 = vld [vmem:[%s3 + $0x20] sm:$0xff]
      %v531 = vld [vmem:[%s3 + $0x28] sm:$0xff]
      %v532 = vld [vmem:[%s3 + $0x30] sm:$0xff]
      %v533 = vld [vmem:[%s3 + $0x38] sm:$0xff]
      %v534 = vld [vmem:[%s3 + $0x40] sm:$0xff]
      %v535 = vld [vmem:[%s3 + $0x48] sm:$0xff]
      %v536 = vld [vmem:[%s3 + $0x50] sm:$0xff]
      %v537 = vld [vmem:[%s3 + $0x58] sm:$0xff]
      %v538 = vld [vmem:[%s3 + $0x60] sm:$0xff]
      %v539 = vld [vmem:[%s3 + $0x68] sm:$0xff]
      %v540 = vld [vmem:[%s3 + $0x70] sm:$0xff]
      %v541 = vld [vmem:[%s3 + $0x78] sm:$0xff]
      %v542 = vld [vmem:[%s3 + $0x80] sm:$0xff]
      %v543 = vld [vmem:[%s3 + $0x88] sm:$0xff]
      %v544 = vld [vmem:[%s3 + $0x90] sm:$0xff]
      %v545 = vld [vmem:[%s3 + $0x98] sm:$0xff]
      %v546 = vld [vmem:[%s3 + $0xa0] sm:$0xff]
      %v547 = vld [vmem:[%s3 + $0xa8] sm:$0xff]
      %v548 = vld [vmem:[%s3 + $0xb0] sm:$0xff]
      %v549 = vld [vmem:[%s3 + $0xb8] sm:$0xff]
      %v550 = vld [vmem:[%s3 + $0xc0] sm:$0xff]
      %v551 = vld [vmem:[%s3 + $0xc8] sm:$0xff]
      %v552 = vld [vmem:[%s3 + $0xd0] sm:$0xff]
      %v553 = vld [vmem:[%s3 + $0xd8] sm:$0xff]
      %v554 = vld [vmem:[%s3 + $0xe0] sm:$0xff]
      %v555 = vld [vmem:[%s3 + $0xe8] sm:$0xff]
      %v556 = vld [vmem:[%s3 + $0xf0] sm:$0xff]
      %v557 = vld [vmem:[%s3 + $0xf8] sm:$0xff]
      %v590 = vunpack.c.l.b16 %v526
      %v591 = vunpack.c.h.b16 %v526
      %v592 = vunpack.c.l.b16 %v527
      %v593 = vunpack.c.h.b16 %v527
      %v594 = vunpack.c.l.b16 %v528
      %v595 = vunpack.c.h.b16 %v528
      %v596 = vunpack.c.l.b16 %v529
      %v597 = vunpack.c.h.b16 %v529
      %v598 = vunpack.c.l.b16 %v530
      %v599 = vunpack.c.h.b16 %v530
      %v600 = vunpack.c.l.b16 %v531
      %v601 = vunpack.c.h.b16 %v531
      %v602 = vunpack.c.l.b16 %v532
      %v603 = vunpack.c.h.b16 %v532
      %v604 = vunpack.c.l.b16 %v533
      %v605 = vunpack.c.h.b16 %v533
      %v606 = vunpack.c.l.b16 %v534
      %v607 = vunpack.c.h.b16 %v534
      %v608 = vunpack.c.l.b16 %v535
      %v609 = vunpack.c.h.b16 %v535
      %v610 = vunpack.c.l.b16 %v536
      %v611 = vunpack.c.h.b16 %v536
      %v612 = vunpack.c.l.b16 %v537
      %v613 = vunpack.c.h.b16 %v537
      %v614 = vunpack.c.l.b16 %v538
      %v615 = vunpack.c.h.b16 %v538
      %v616 = vunpack.c.l.b16 %v539
      %v617 = vunpack.c.h.b16 %v539
      %v618 = vunpack.c.l.b16 %v540
      %v619 = vunpack.c.h.b16 %v540
      %v620 = vunpack.c.l.b16 %v541
      %v621 = vunpack.c.h.b16 %v541
      %v622 = vunpack.c.l.b16 %v542
      %v623 = vunpack.c.h.b16 %v542
      %v624 = vunpack.c.l.b16 %v543
      %v625 = vunpack.c.h.b16 %v543
      %v626 = vunpack.c.l.b16 %v544
      %v627 = vunpack.c.h.b16 %v544
      %v628 = vunpack.c.l.b16 %v545
      %v629 = vunpack.c.h.b16 %v545
      %v630 = vunpack.c.l.b16 %v546
      %v631 = vunpack.c.h.b16 %v546
      %v632 = vunpack.c.l.b16 %v547
      %v633 = vunpack.c.h.b16 %v547
      %v634 = vunpack.c.l.b16 %v548
      %v635 = vunpack.c.h.b16 %v548
      %v636 = vunpack.c.l.b16 %v549
      %v637 = vunpack.c.h.b16 %v549
      %v638 = vunpack.c.l.b16 %v550
      %v639 = vunpack.c.h.b16 %v550
      %v640 = vunpack.c.l.b16 %v551
      %v641 = vunpack.c.h.b16 %v551
      %v642 = vunpack.c.l.b16 %v552
      %v643 = vunpack.c.h.b16 %v552
      %v644 = vunpack.c.l.b16 %v553
      %v645 = vunpack.c.h.b16 %v553
      %v646 = vunpack.c.l.b16 %v554
      %v647 = vunpack.c.h.b16 %v554
      %v648 = vunpack.c.l.b16 %v555
      %v649 = vunpack.c.h.b16 %v555
      %v650 = vunpack.c.l.b16 %v556
      %v651 = vunpack.c.h.b16 %v556
      %v652 = vunpack.c.l.b16 %v557
      %v653 = vunpack.c.h.b16 %v557
      %v654 = vpack.c.b16 %v592, %v590
      %v655 = vpack.c.b16 %v593, %v591
      %v656 = vpack.c.b16 %v596, %v594
      %v657 = vpack.c.b16 %v597, %v595
      %v658 = vpack.c.b16 %v600, %v598
      %v659 = vpack.c.b16 %v601, %v599
      %v660 = vpack.c.b16 %v604, %v602
      %v661 = vpack.c.b16 %v605, %v603
      %v662 = vpack.c.b16 %v608, %v606
      %v663 = vpack.c.b16 %v609, %v607
      %v664 = vpack.c.b16 %v612, %v610
      %v665 = vpack.c.b16 %v613, %v611
      %v666 = vpack.c.b16 %v616, %v614
      %v667 = vpack.c.b16 %v617, %v615
      %v668 = vpack.c.b16 %v620, %v618
      %v669 = vpack.c.b16 %v621, %v619
      %v670 = vpack.c.b16 %v624, %v622
      %v671 = vpack.c.b16 %v625, %v623
      %v672 = vpack.c.b16 %v628, %v626
      %v673 = vpack.c.b16 %v629, %v627
      %v674 = vpack.c.b16 %v632, %v630
      %v675 = vpack.c.b16 %v633, %v631
      %v676 = vpack.c.b16 %v636, %v634
      %v677 = vpack.c.b16 %v637, %v635
      %v678 = vpack.c.b16 %v640, %v638
      %v679 = vpack.c.b16 %v641, %v639
      %v680 = vpack.c.b16 %v644, %v642
      %v681 = vpack.c.b16 %v645, %v643
      %v682 = vpack.c.b16 %v648, %v646
      %v683 = vpack.c.b16 %v649, %v647
      %v684 = vpack.c.b16 %v652, %v650
      %v685 = vpack.c.b16 %v653, %v651
      %718 = vmatprep.subr.bf16.mxu0 %v655
      %719 = vmatpush1.bf16.msra.mxu0 %v654
      %720 = vmatprep.subr.bf16.mxu0 %v657
      %721 = vmatpush1.bf16.msra.mxu0 %v656
      %722 = vmatprep.subr.bf16.mxu0 %v659
      %723 = vmatpush1.bf16.msra.mxu0 %v658
      %724 = vmatprep.subr.bf16.mxu0 %v661
      %725 = vmatpush1.bf16.msra.mxu0 %v660
      %726 = vmatprep.subr.bf16.mxu0 %v663
      %727 = vmatpush1.bf16.msra.mxu0 %v662
      %728 = vmatprep.subr.bf16.mxu0 %v665
      %729 = vmatpush1.bf16.msra.mxu0 %v664
      %730 = vmatprep.subr.bf16.mxu0 %v667
      %731 = vmatpush1.bf16.msra.mxu0 %v666
      %732 = vmatprep.subr.bf16.mxu0 %v669
      %733 = vmatpush1.bf16.msra.mxu0 %v668
      %734 = vmatprep.subr.bf16.mxu0 %v671
      %735 = vmatpush1.bf16.msra.mxu0 %v670
      %736 = vmatprep.subr.bf16.mxu0 %v673
      %737 = vmatpush1.bf16.msra.mxu0 %v672
      %738 = vmatprep.subr.bf16.mxu0 %v675
      %739 = vmatpush1.bf16.msra.mxu0 %v674
      %740 = vmatprep.subr.bf16.mxu0 %v677
      %741 = vmatpush1.bf16.msra.mxu0 %v676
      %742 = vmatprep.subr.bf16.mxu0 %v679
      %743 = vmatpush1.bf16.msra.mxu0 %v678
      %744 = vmatprep.subr.bf16.mxu0 %v681
      %745 = vmatpush1.bf16.msra.mxu0 %v680
      %746 = vmatprep.subr.bf16.mxu0 %v683
      %747 = vmatpush1.bf16.msra.mxu0 %v682
      %748 = vmatprep.subr.bf16.mxu0 %v685
      %749 = vmatpush1.bf16.msra.mxu0 %v684
      %750 = vmatprep.mubr.bf16.mxu0 %v523
      %751 = vmatmul.mubr.bf16.gmra.mrb[0].mxu0 %v522
      %v752 = vpop.f32.mrb[0].mxu0
      %v753 = vadd.f32 0.0, %v752
      %v754 = vpop.f32.mrb[0].mxu0
      %v755 = vadd.f32 0.0, %v754
      %v756 = vpop.f32.mrb[0].mxu0
      %v757 = vadd.f32 0.0, %v756
      %v758 = vpop.f32.mrb[0].mxu0
      %v759 = vadd.f32 0.0, %v758
      %760 = vmatprep.mubr.bf16.mxu0 %v525
      %761 = vmatmul.mubr.bf16.gmra.mrb[0].mxu0 %v524
      %v762 = vpop.f32.mrb[0].mxu0
      %v763 = vadd.f32 0.0, %v762
      %v764 = vpop.f32.mrb[0].mxu0
      %v765 = vadd.f32 0.0, %v764
      %v766 = vpop.f32.mrb[0].mxu0
      %v767 = vadd.f32 0.0, %v766
      %v768 = vpop.f32.mrb[0].mxu0
      %v769 = vadd.f32 0.0, %v768
      %770 = vdwg.mxu0
      %v771 = vld [vmem:[%s5] sm:$0x1]
      %v773 = vlaneseq
      %v774 = vshrl.u32 %v773, 7
      %v775 = vsub.s32 0, %v774
      %v776 = vrot.slane %v771, %v775
      %v778 = vadd.f32 %v753, %v776
      %v779 = vadd.f32 %v757, %v776
      %v780 = vadd.f32 %v763, %v776
      %v781 = vadd.f32 %v767, %v776
      %v782 = vld [vmem:[%s4] sm:$0x3]
      %v784 = vlaneseq
      %v785 = vshrl.u32 %v784, 7
      %v786 = vsub.s32 0, %v785
      %v787 = vrot.slane %v782, %v786
      %v788 = vlaneseq
      %v789 = vshrl.u32 %v788, 7
      %v790 = vsub.s32 1, %v789
      %v791 = vrot.slane %v782, %v790
      %v794 = vadd.f32 %v753, %v787
      %v795 = vadd.f32 %v755, %v791
      %v796 = vadd.f32 %v757, %v787
      %v797 = vadd.f32 %v759, %v791
      %v798 = vadd.f32 %v763, %v787
      %v799 = vadd.f32 %v765, %v791
      %v800 = vadd.f32 %v767, %v787
      %v801 = vadd.f32 %v769, %v791
      %v802 = vmax.f32 %v794, 0.0
      %v803 = vmax.f32 %v795, 0.0
      %v804 = vmax.f32 %v796, 0.0
      %v805 = vmax.f32 %v797, 0.0
      %v806 = vmax.f32 %v798, 0.0
      %v807 = vmax.f32 %v799, 0.0
      %v808 = vmax.f32 %v800, 0.0
      %v809 = vmax.f32 %v801, 0.0
      %v810 = vpack.c.bf16 %v804, %v802
      %v811 = vpack.c.bf16 %v805, %v803
      %v812 = vpack.c.bf16 %v808, %v806
      %v813 = vpack.c.bf16 %v809, %v807
      %v814 = vld [vmem:[%s6] sm:$0xf]
      %v815 = vld [vmem:[%s6 + $0x4] sm:$0xf]
      %v816 = vld [vmem:[%s6 + $0x8] sm:$0xf]
      %v817 = vld [vmem:[%s6 + $0xc] sm:$0xf]
      %v818 = vld [vmem:[%s6 + $0x10] sm:$0xf]
      %v819 = vld [vmem:[%s6 + $0x14] sm:$0xf]
      %v820 = vld [vmem:[%s6 + $0x18] sm:$0xf]
      %v821 = vld [vmem:[%s6 + $0x1c] sm:$0xf]
      %v822 = vld [vmem:[%s6 + $0x20] sm:$0xf]
      %v823 = vld [vmem:[%s6 + $0x24] sm:$0xf]
      %v824 = vld [vmem:[%s6 + $0x28] sm:$0xf]
      %v825 = vld [vmem:[%s6 + $0x2c] sm:$0xf]
      %v826 = vld [vmem:[%s6 + $0x30] sm:$0xf]
      %v827 = vld [vmem:[%s6 + $0x34] sm:$0xf]
      %v828 = vld [vmem:[%s6 + $0x38] sm:$0xf]
      %v829 = vld [vmem:[%s6 + $0x3c] sm:$0xf]
      %v830 = vld [vmem:[%s6 + $0x40] sm:$0xf]
      %v831 = vld [vmem:[%s6 + $0x44] sm:$0xf]
      %v832 = vld [vmem:[%s6 + $0x48] sm:$0xf]
      %v833 = vld [vmem:[%s6 + $0x4c] sm:$0xf]
      %v834 = vld [vmem:[%s6 + $0x50] sm:$0xf]
      %v835 = vld [vmem:[%s6 + $0x54] sm:$0xf]
      %v836 = vld [vmem:[%s6 + $0x58] sm:$0xf]
      %v837 = vld [vmem:[%s6 + $0x5c] sm:$0xf]
      %v862 = vunpack.c.l.b16 %v814
      %v863 = vunpack.c.l.b16 %v815
      %v864 = vunpack.c.l.b16 %v816
      %v865 = vunpack.c.l.b16 %v817
      %v866 = vunpack.c.l.b16 %v818
      %v867 = vunpack.c.l.b16 %v819
      %v868 = vunpack.c.l.b16 %v820
      %v869 = vunpack.c.l.b16 %v821
      %v870 = vunpack.c.l.b16 %v822
      %v871 = vunpack.c.l.b16 %v823
      %v872 = vunpack.c.l.b16 %v824
      %v873 = vunpack.c.l.b16 %v825
      %v874 = vunpack.c.l.b16 %v826
      %v875 = vunpack.c.l.b16 %v827
      %v876 = vunpack.c.l.b16 %v828
      %v877 = vunpack.c.l.b16 %v829
      %v878 = vunpack.c.l.b16 %v830
      %v879 = vunpack.c.l.b16 %v831
      %v880 = vunpack.c.l.b16 %v832
      %v881 = vunpack.c.l.b16 %v833
      %v882 = vunpack.c.l.b16 %v834
      %v883 = vunpack.c.l.b16 %v835
      %v884 = vunpack.c.l.b16 %v836
      %v885 = vunpack.c.l.b16 %v837
      %v886 = vpack.c.b16 %v863, %v862
      %v887 = vpack.c.b16 %v865, %v864
      %v888 = vpack.c.b16 %v867, %v866
      %v889 = vpack.c.b16 %v869, %v868
      %v890 = vpack.c.b16 %v871, %v870
      %v891 = vpack.c.b16 %v873, %v872
      %v892 = vpack.c.b16 %v875, %v874
      %v893 = vpack.c.b16 %v877, %v876
      %v894 = vpack.c.b16 %v879, %v878
      %v895 = vpack.c.b16 %v881, %v880
      %v896 = vpack.c.b16 %v883, %v882
      %v897 = vpack.c.b16 %v885, %v884
      %vm910 = vcmask 523264
      %v912 = vsel %vm910, %v811, 0
      %v915 = vsel %vm910, %v813, 0
      %917 = vmatprep.subr.bf16.mxu0 0
      %918 = vmatpush1.bf16.msra.mxu0 %v886
      %919 = vmatprep.subr.bf16.mxu0 0
      %920 = vmatpush1.bf16.msra.mxu0 %v887
      %921 = vmatprep.subr.bf16.mxu0 0
      %922 = vmatpush1.bf16.msra.mxu0 %v888
      %923 = vmatprep.subr.bf16.mxu0 0
      %924 = vmatpush1.bf16.msra.mxu0 %v889
      %925 = vmatprep.subr.bf16.mxu0 0
      %926 = vmatpush1.bf16.msra.mxu0 %v890
      %927 = vmatprep.subr.bf16.mxu0 0
      %928 = vmatpush1.bf16.msra.mxu0 %v891
      %929 = vmatprep.subr.bf16.mxu0 0
      %930 = vmatpush1.bf16.msra.mxu0 %v892
      %931 = vmatprep.subr.bf16.mxu0 0
      %932 = vmatpush1.bf16.msra.mxu0 %v893
      %933 = vmatprep.subr.bf16.mxu0 0
      %934 = vmatpush1.bf16.msra.mxu0 %v894
      %935 = vmatprep.subr.bf16.mxu0 0
      %936 = vmatpush1.bf16.msra.mxu0 %v895
      %937 = vmatprep.subr.bf16.mxu0 0
      %938 = vmatpush1.bf16.msra.mxu0 %v896
      %939 = vmatprep.subr.bf16.mxu0 0
      %940 = vmatpush1.bf16.msra.mxu0 %v897
      %941 = vmatprep.subr.bf16.mxu0 0
      %942 = vmatpush1.bf16.msra.mxu0 0
      %943 = vmatprep.subr.bf16.mxu0 0
      %944 = vmatpush1.bf16.msra.mxu0 0
      %945 = vmatprep.subr.bf16.mxu0 0
      %946 = vmatpush1.bf16.msra.mxu0 0
      %947 = vmatprep.subr.bf16.mxu0 0
      %948 = vmatpush1.bf16.msra.mxu0 0
      %949 = vmatprep.mubr.bf16.mxu0 %v912
      %950 = vmatmul.mubr.bf16.gmra.mrb[0].mxu0 %v810
      %v951 = vpop.f32.mrb[0].mxu0
      %v952 = vadd.f32 0.0, %v951
      %v953 = vpop.f32.mrb[0].mxu0
      %v954 = vpop.f32.mrb[0].mxu0
      %v955 = vadd.f32 0.0, %v954
      %v956 = vpop.f32.mrb[0].mxu0
      %957 = vmatprep.mubr.bf16.mxu0 %v915
      %958 = vmatmul.mubr.bf16.gmra.mrb[0].mxu0 %v812
      %v959 = vpop.f32.mrb[0].mxu0
      %v960 = vadd.f32 0.0, %v959
      %v961 = vpop.f32.mrb[0].mxu0
      %v962 = vpop.f32.mrb[0].mxu0
      %v963 = vadd.f32 0.0, %v962
      %v964 = vpop.f32.mrb[0].mxu0
      %965 = vdwg.mxu0
      %v966 = vadd.f32 %v778, %v952
      %v967 = vadd.f32 %v779, %v955
      %v968 = vadd.f32 %v780, %v960
      %v969 = vadd.f32 %v781, %v963
      %v970 = vld [vmem:[%s7] sm:$0x1]
      %v972 = vlaneseq
      %v973 = vshrl.u32 %v972, 7
      %v974 = vsub.s32 0, %v973
      %v975 = vrot.slane %v970, %v974
      %v977 = vadd.f32 %v966, %v975
      %v978 = vadd.f32 %v967, %v975
      %v979 = vadd.f32 %v968, %v975
      %v980 = vadd.f32 %v969, %v975
      %v981 = vmul.f32 %v977, %v977
      %v982 = vmul.f32 %v978, %v978
      %v983 = vmul.f32 %v979, %v979
      %v984 = vmul.f32 %v980, %v980
      %v985 = vld [vmem:[%s8] sm:$0xff]
      %v986 = vld [vmem:[%s8 + $0x8] sm:$0xff]
      %v987 = vld [vmem:[%s8 + $0x10] sm:$0xff]
      %v988 = vld [vmem:[%s8 + $0x18] sm:$0xff]
      %v989 = vld [vmem:[%s8 + $0x20] sm:$0xff]
      %v990 = vld [vmem:[%s8 + $0x28] sm:$0xff]
      %v991 = vld [vmem:[%s8 + $0x30] sm:$0xff]
      %v992 = vld [vmem:[%s8 + $0x38] sm:$0xff]
      %v993 = vld [vmem:[%s8 + $0x40] sm:$0xff]
      %v994 = vld [vmem:[%s8 + $0x48] sm:$0xff]
      %v995 = vld [vmem:[%s8 + $0x50] sm:$0xff]
      %v996 = vld [vmem:[%s8 + $0x58] sm:$0xff]
      %v997 = vld [vmem:[%s8 + $0x60] sm:$0xff]
      %v998 = vld [vmem:[%s8 + $0x68] sm:$0xff]
      %v999 = vld [vmem:[%s8 + $0x70] sm:$0xff]
      %v1000 = vld [vmem:[%s8 + $0x78] sm:$0xff]
      %1001 = vmatprep.subr.mxu0 0.0
      %1002 = vmatpush1.msra.mxu0 %v985
      %1003 = vmatprep.subr.mxu0 0.0
      %1004 = vmatpush1.msra.mxu0 %v986
      %1005 = vmatprep.subr.mxu0 0.0
      %1006 = vmatpush1.msra.mxu0 %v987
      %1007 = vmatprep.subr.mxu0 0.0
      %1008 = vmatpush1.msra.mxu0 %v988
      %1009 = vmatprep.subr.mxu0 0.0
      %1010 = vmatpush1.msra.mxu0 %v989
      %1011 = vmatprep.subr.mxu0 0.0
      %1012 = vmatpush1.msra.mxu0 %v990
      %1013 = vmatprep.subr.mxu0 0.0
      %1014 = vmatpush1.msra.mxu0 %v991
      %1015 = vmatprep.subr.mxu0 0.0
      %1016 = vmatpush1.msra.mxu0 %v992
      %1017 = vmatprep.subr.mxu0 0.0
      %1018 = vmatpush1.msra.mxu0 %v993
      %1019 = vmatprep.subr.mxu0 0.0
      %1020 = vmatpush1.msra.mxu0 %v994
      %1021 = vmatprep.subr.mxu0 0.0
      %1022 = vmatpush1.msra.mxu0 %v995
      %1023 = vmatprep.subr.mxu0 0.0
      %1024 = vmatpush1.msra.mxu0 %v996
      %1025 = vmatprep.subr.mxu0 0.0
      %1026 = vmatpush1.msra.mxu0 %v997
      %1027 = vmatprep.subr.mxu0 0.0
      %1028 = vmatpush1.msra.mxu0 %v998
      %1029 = vmatprep.subr.mxu0 0.0
      %1030 = vmatpush1.msra.mxu0 %v999
      %1031 = vmatprep.subr.mxu0 0.0
      %1032 = vmatpush1.msra.mxu0 %v1000
      %1033 = vmatprep.subr.mxu0 0.0
      %1034 = vmatpush1.msra.mxu0 0.0
      %1035 = vmatprep.subr.mxu0 0.0
      %1036 = vmatpush1.msra.mxu0 0.0
      %1037 = vmatprep.subr.mxu0 0.0
      %1038 = vmatpush1.msra.mxu0 0.0
      %1039 = vmatprep.subr.mxu0 0.0
      %1040 = vmatpush1.msra.mxu0 0.0
      %1041 = vmatprep.subr.mxu0 0.0
      %1042 = vmatpush1.msra.mxu0 0.0
      %1043 = vmatprep.subr.mxu0 0.0
      %1044 = vmatpush1.msra.mxu0 0.0
      %1045 = vmatprep.subr.mxu0 0.0
      %1046 = vmatpush1.msra.mxu0 0.0
      %1047 = vmatprep.subr.mxu0 0.0
      %1048 = vmatpush1.msra.mxu0 0.0
      %1049 = vmatprep.subr.mxu0 0.0
      %1050 = vmatpush1.msra.mxu0 0.0
      %1051 = vmatprep.subr.mxu0 0.0
      %1052 = vmatpush1.msra.mxu0 0.0
      %1053 = vmatprep.subr.mxu0 0.0
      %1054 = vmatpush1.msra.mxu0 0.0
      %1055 = vmatprep.subr.mxu0 0.0
      %1056 = vmatpush1.msra.mxu0 0.0
      %1057 = vmatprep.subr.mxu0 0.0
      %1058 = vmatpush1.msra.mxu0 0.0
      %1059 = vmatprep.subr.mxu0 0.0
      %1060 = vmatpush1.msra.mxu0 0.0
      %1061 = vmatprep.subr.mxu0 0.0
      %1062 = vmatpush1.msra.mxu0 0.0
      %1063 = vmatprep.subr.mxu0 0.0
      %1064 = vmatpush1.msra.mxu0 0.0
      %1065 = vmatprep.mubr.f32.mxu0 0.0
      %1066 = vmatmul.mubr.f32.gmra.mrb[0].mxu0 %v981
      %v1067 = vpop.f32.mrb[0].mxu0
      %v1068 = vadd.f32 1e-08, %v1067
      %v1069 = vpop.f32.mrb[0].mxu0
      %1070 = vmatprep.mubr.f32.mxu0 0.0
      %1071 = vmatmul.mubr.f32.gmra.mrb[0].mxu0 %v982
      %v1072 = vpop.f32.mrb[0].mxu0
      %v1073 = vadd.f32 1e-08, %v1072
      %v1074 = vpop.f32.mrb[0].mxu0
      %1075 = vmatprep.mubr.f32.mxu0 0.0
      %1076 = vmatmul.mubr.f32.gmra.mrb[0].mxu0 %v983
      %v1077 = vpop.f32.mrb[0].mxu0
      %v1078 = vadd.f32 1e-08, %v1077
      %v1079 = vpop.f32.mrb[0].mxu0
      %1080 = vmatprep.mubr.f32.mxu0 0.0
      %1081 = vmatmul.mubr.f32.gmra.mrb[0].mxu0 %v984
      %v1082 = vpop.f32.mrb[0].mxu0
      %v1083 = vadd.f32 1e-08, %v1082
      %v1084 = vpop.f32.mrb[0].mxu0
      %1085 = vdwg.mxu0
      %v1086 = vrsqrt.pop %v1068
      %v1087 = vrsqrt.pop %v1073
      %v1088 = vrsqrt.pop %v1078
      %v1089 = vrsqrt.pop %v1083
      %v1090 = vmul.f32 %v977, %v1086
      %v1091 = vmul.f32 %v978, %v1087
      %v1092 = vmul.f32 %v979, %v1088
      %v1093 = vmul.f32 %v980, %v1089
      %1094 = vst [vmem:[%s334] sm:$0xff] %v1090
      %1095 = vst [vmem:[%s334 + $0x8] sm:$0xff] %v1091
      %1096 = vst [vmem:[%s334 + $0x10] sm:$0xff] %v1092
      %1097 = vst [vmem:[%s334 + $0x18] sm:$0xff] %v1093
      %s1098 = smul.u32 4, %s20
      %p1099 = scmp.lt.s32.totalorder %s1098, 15
      %s1100 = scalar_select %p1099, %s1098, 15
      %s1101 = smul.addr %s1100, 8
      %s1102 = scalar_lea.vmem %s9, %s1101
      // Predicated region
      $region57: #{_imgcnn_forward.1} parent=55 // pred_check
        %p1103 = pneg %p232
      $region58: #{_imgcnn_forward.1} parent=55 // pred_check_branch
        %1105 = sbr.rel (%p1103) target = $region60
      $region59: #{_imgcnn_forward.1} parent=55 // pred_region
        %s1106 = smul.u32 4, %s20
      $region60: #{_imgcnn_forward.1} parent=55 // pred_fallthru
        _
    $region56: #{_imgcnn_forward.1} parent=5 // pred_fallthru
      _
    %p1107 = scmp.le.s32.totalorder 2, %s15
    // Predicated region
    $region61: #{_imgcnn_forward.1} parent=5 // pred_check
      %p1108 = pneg %p1107
    $region62: #{_imgcnn_forward.1} parent=5 // pred_check_branch
      %1110 = sbr.rel (%p1108) target = $region64
    $region63: #{_imgcnn_forward.1} parent=5 // pred_region
      %s1111 = ssub.s32 %s15, 2
      // Predicated region
      $region65: #{_imgcnn_forward.1} parent=63 // pred_check
        %p1112 = pneg %p238
      $region66: #{_imgcnn_forward.1} parent=63 // pred_check_branch
        %1114 = sbr.rel (%p1112) target = $region68
      $region67: #{_imgcnn_forward.1} parent=63 // pred_region
        %s1115 = smul.u32 4, %s21
        %p1116 = scmp.lt.s32.totalorder %s1115, 15
        %s1117 = scalar_select %p1116, %s1115, 15
        %s1118 = smul.addr %s1117, 8
        %s1119 = scalar_lea.vmem %s9, %s1118
      $region68: #{_imgcnn_forward.1} parent=63 // pred_fallthru
        _
    $region64: #{_imgcnn_forward.1} parent=5 // pred_fallthru
      _
  $region6: #{_imgcnn_forward.1} parent=0 // loop_footer
    %s19 = sadd.s32 1, %s15
  $region7: #{_imgcnn_forward.1} parent=0 // loop_footer_branch
    %14 = sbr.rel target = $region3
  $region8: #{_imgcnn_forward.1} parent=0 // loop_exit
    _

</llo_original>
